<compile_context>
chip_gen: v7x
topology: tpu7x:2x2x1
jax: 0.10.0
libtpu: 0.0.40
codegen_flags: <defaults>
</compile_context>

<pallas_src>
import jax
import jax.numpy as jnp
import numpy as np
from jax.experimental import pallas as pl
from jax.experimental.pallas import tpu as pltpu


def _round_up(x, m):
    return ((x + m - 1) // m) * m


def fusion_kernel(xe_ref, xc_ref, xg_ref,
                  we_ref, wc_ref, wg_ref, bsub_ref,
                  wfc_ref, bfc_ref, o_ref):
    """One batch tile of the fused forward pass.

    xe/xc/xg_ref : (TILE_B, D_i)  raw input streams (no packing pass)
    we/wc/wg_ref : (D_i, 12)      sub-model weights zero-padded into their 4-col slot
    bsub_ref     : (1, 12)        [b_eeg | b_ecg | b_gsr]
    wfc_ref      : (12, 4)        fc weight (pre-transposed)
    bfc_ref      : (1, 4)         fc bias
    o_ref        : (TILE_B, 4)
    """
    # Three sub-model Linears accumulate into one (TILE_B, 12) activation.
    # Zero-padded columns contribute exact zeros, so this equals cat(o_e,o_c,o_g).
    h = jnp.dot(xe_ref[...], we_ref[...], preferred_element_type=jnp.float32)
    h = h + jnp.dot(xc_ref[...], wc_ref[...], preferred_element_type=jnp.float32)
    h = h + jnp.dot(xg_ref[...], wg_ref[...], preferred_element_type=jnp.float32)
    # relu(cat(...) + biases)  -- single broadcast VPU add.
    h = jnp.maximum(h + bsub_ref[...], 0.0)
    # fc: Linear(12, 4).
    y = jnp.dot(h, wfc_ref[...], preferred_element_type=jnp.float32) + bfc_ref[...]
    # TODO(synk): once input streaming puts this at the HBM roofline, a
    # lane-dense (TILE_B//32, 128) reshape before the store would replace the
    # 4-lane masked stores; skipped here to keep the lowering path simple/safe.
    o_ref[...] = y.astype(o_ref.dtype)


def pack_fusion_params(we, be, wc, bc, wg, bg, wf, bf, dtype=jnp.float32):
    """Pack the 10 per-module tensors into 6 small VMEM-resident operands.

    Linear(d_in, d_out) weights are given pre-transposed as (d_in, d_out),
    biases as (1, d_out).  Each sub-model weight is zero-padded to 12 output
    columns (its own 4-column slot) so the three dots accumulate directly into
    the concatenated 12-feature activation.
    """
    we12 = jnp.zeros((we.shape[0], 12), dtype).at[:, 0:4].set(we.astype(dtype))
    wc12 = jnp.zeros((wc.shape[0], 12), dtype).at[:, 4:8].set(wc.astype(dtype))
    wg12 = jnp.zeros((wg.shape[0], 12), dtype).at[:, 8:12].set(wg.astype(dtype))
    b12 = jnp.concatenate(
        [be.reshape(1, 4), bc.reshape(1, 4), bg.reshape(1, 4)], axis=1
    ).astype(jnp.float32)
    return (we12, wc12, wg12, b12,
            wf.astype(dtype), bf.reshape(1, 4).astype(jnp.float32))


# VMEM budget: 3 input + 1 output streams, lanes padded to 128, f32, double
# buffered  ->  4 KiB per batch row.  6144 rows ~= 24 MiB < 32 MiB scoped VMEM
# (safe on v5e/v6e/v7x alike).
_MAX_TILE_ROWS = 6144


def _choose_tile(batch, tile_b):
    tile = min(_round_up(max(tile_b, 8), 8), _MAX_TILE_ROWS)
    b8 = _round_up(batch, 8)
    if tile >= b8:
        # Small batch: split into two tiles so both v7x TensorCores get a grid
        # step ("parallel" axis); harmless on single-TC v5e/v6e.  Never below
        # one 8-row sublane tile.
        tile = max(_round_up(pl.cdiv(b8, 2), 8), 8)
    return tile


def fusion_forward(x_eeg, x_ecg, x_gsr, packed_params, *, tile_b=4096):
    """Fused forward pass.  packed_params = pack_fusion_params(...)."""
    we12, wc12, wg12, b12, wfc, bfc = packed_params
    B = x_eeg.shape[0]
    d_e, d_c, d_g = x_eeg.shape[1], x_ecg.shape[1], x_gsr.shape[1]
    assert (d_e, d_c, d_g) == (we12.shape[0], wc12.shape[0], wg12.shape[0])

    tile = _choose_tile(B, tile_b)
    grid = (pl.cdiv(B, tile),)          # ragged tail handled by Pallas (clamped DMAs)

    in_bytes = sum(int(np.prod(a.shape)) * a.dtype.itemsize
                   for a in (x_eeg, x_ecg, x_gsr))
    w_bytes = sum(int(np.prod(w.shape)) * w.dtype.itemsize
                  for w in (we12, wc12, wg12, b12, wfc, bfc))
    cost = pl.CostEstimate(
        flops=int(2 * B * ((d_e + d_c + d_g) * 12 + 12 * 4)),
        transcendentals=0,
        bytes_accessed=int(in_bytes + w_bytes + B * 4 * 4),
    )

    return pl.pallas_call(
        fusion_kernel,
        out_shape=jax.ShapeDtypeStruct((B, 4), jnp.float32),
        grid_spec=pltpu.PrefetchScalarGridSpec(
            num_scalar_prefetch=0,
            grid=grid,
            in_specs=[
                # Streamed batch tiles (double-buffered HBM->VMEM by Pallas).
                pl.BlockSpec((tile, d_e), lambda i: (i, 0)),
                pl.BlockSpec((tile, d_c), lambda i: (i, 0)),
                pl.BlockSpec((tile, d_g), lambda i: (i, 0)),
                # Small weights/biases: constant index_map -> fetched once and
                # VMEM-resident across all grid steps.
                pl.BlockSpec(we12.shape, lambda i: (0, 0)),
                pl.BlockSpec(wc12.shape, lambda i: (0, 0)),
                pl.BlockSpec(wg12.shape, lambda i: (0, 0)),
                pl.BlockSpec(b12.shape, lambda i: (0, 0)),
                pl.BlockSpec(wfc.shape, lambda i: (0, 0)),
                pl.BlockSpec(bfc.shape, lambda i: (0, 0)),
            ],
            out_specs=pl.BlockSpec((tile, 4), lambda i: (i, 0)),
        ),
        compiler_params=pltpu.CompilerParams(
            # Independent batch tiles: lets v7x shard the grid across its 2 TCs;
            # harmless no-op on v5e/v6e.
            dimension_semantics=("parallel",),
            # Explicit limit: v5e's scoped default is only 16 MiB.
            vmem_limit_bytes=32 * 1024 * 1024,
        ),
        cost_estimate=cost,
    )(x_eeg, x_ecg, x_gsr, we12, wc12, wg12, b12, wfc, bfc)


def _init_linear(key, d_in, d_out):
    """Deterministic Kaiming-uniform-ish init; weight returned pre-transposed."""
    kw, kb = jax.random.split(key)
    bound = 1.0 / np.sqrt(d_in)
    w = jax.random.uniform(kw, (d_in, d_out), jnp.float32, -bound, bound)
    b = jax.random.uniform(kb, (1, d_out), jnp.float32, -bound, bound)
    return w, b


def reference_forward(x_eeg, x_ecg, x_gsr, raw_params):
    """Pure-JAX reference matching the PyTorch forward exactly."""
    we, be, wc, bc, wg, bg, wf, bf = raw_params
    o_eeg = x_eeg @ we + be
    o_ecg = x_ecg @ wc + bc
    o_gsr = x_gsr @ wg + bg
    fused = jnp.concatenate([o_eeg, o_ecg, o_gsr], axis=1)
    h = jax.nn.relu(fused)
    return h @ wf + bf


if __name__ == "__main__":
    # Small deterministic example shapes; B=100 is intentionally NOT a multiple
    # of the tile so the ragged edge-block path is exercised.
    B, D_EEG, D_ECG, D_GSR = 100, 32, 32, 16

    root = jax.random.PRNGKey(0)
    k_xe, k_xc, k_xg, k_le, k_lc, k_lg, k_fc = jax.random.split(root, 7)

    x_eeg = jax.random.normal(k_xe, (B, D_EEG), jnp.float32)
    x_ecg = jax.random.normal(k_xc, (B, D_ECG), jnp.float32)
    x_gsr = jax.random.normal(k_xg, (B, D_GSR), jnp.float32)

    # TODO(synk): the eeg/ecg/gsr sub-models are injected and unspecified in the
    # PyTorch source; each is realised here as a deterministic Linear(D_in, 4)
    # producing the 4 features the fusion head expects.
    we, be = _init_linear(k_le, D_EEG, 4)
    wc, bc = _init_linear(k_lc, D_ECG, 4)
    wg, bg = _init_linear(k_lg, D_GSR, 4)

    # Fusion fc: Linear(12, 4).
    wf, bf = _init_linear(k_fc, 12, 4)

    raw_params = (we, be, wc, bc, wg, bg, wf, bf)
    packed = pack_fusion_params(*raw_params)

    # Small tile so the batch grid has several steps plus a ragged tail
    # (exercises pipelining and edge-block masking); production default is 4096.
    out = fusion_forward(x_eeg, x_ecg, x_gsr, packed, tile_b=32)
    out = jax.block_until_ready(out)

    ref = reference_forward(x_eeg, x_ecg, x_gsr, raw_params)
    np.testing.assert_allclose(np.asarray(out), np.asarray(ref),
                               rtol=1e-5, atol=1e-5)
    print("KERNEL_OK")
</pallas_src>

<mosaic_0001>
module attributes {stable_mosaic.version = 11 : i64} {
  func.func @fusion_kernel(%arg0: i32, %arg1: memref<32x32xf32, #tpu.memory_space<vmem>>, %arg2: memref<32x32xf32, #tpu.memory_space<vmem>>, %arg3: memref<32x16xf32, #tpu.memory_space<vmem>>, %arg4: memref<32x12xf32, #tpu.memory_space<vmem>>, %arg5: memref<32x12xf32, #tpu.memory_space<vmem>>, %arg6: memref<16x12xf32, #tpu.memory_space<vmem>>, %arg7: memref<1x12xf32, #tpu.memory_space<vmem>>, %arg8: memref<12x4xf32, #tpu.memory_space<vmem>>, %arg9: memref<1x4xf32, #tpu.memory_space<vmem>>, %arg10: memref<32x4xf32, #tpu.memory_space<vmem>>) attributes {dimension_semantics = [#tpu.dimension_semantics<parallel>], iteration_bounds = array<i64: 4>, scalar_prefetch = 0 : i64, scratch_operands = 0 : i64, tpu.core_type = #tpu.core_type<tc>, window_params = [{transform_indices = @transform_0, window_bounds = array<i64: 32, 32>}, {transform_indices = @transform_1, window_bounds = array<i64: 32, 32>}, {transform_indices = @transform_2, window_bounds = array<i64: 32, 16>}, {pipeline_mode = #tpu.pipeline_mode<synchronous>, transform_indices = @transform_3, window_bounds = array<i64: 32, 12>}, {pipeline_mode = #tpu.pipeline_mode<synchronous>, transform_indices = @transform_4, window_bounds = array<i64: 32, 12>}, {pipeline_mode = #tpu.pipeline_mode<synchronous>, transform_indices = @transform_5, window_bounds = array<i64: 16, 12>}, {pipeline_mode = #tpu.pipeline_mode<synchronous>, transform_indices = @transform_6, window_bounds = array<i64: 1, 12>}, {pipeline_mode = #tpu.pipeline_mode<synchronous>, transform_indices = @transform_7, window_bounds = array<i64: 12, 4>}, {pipeline_mode = #tpu.pipeline_mode<synchronous>, transform_indices = @transform_8, window_bounds = array<i64: 1, 4>}, {transform_indices = @transform_9, window_bounds = array<i64: 32, 4>}]} {
    %c0 = arith.constant 0 : index
    %c0_0 = arith.constant 0 : index
    %0 = vector.load %arg1[%c0, %c0_0] : memref<32x32xf32, #tpu.memory_space<vmem>>, vector<32x32xf32>
    %c0_1 = arith.constant 0 : index
    %c0_2 = arith.constant 0 : index
    %1 = vector.load %arg4[%c0_1, %c0_2] : memref<32x12xf32, #tpu.memory_space<vmem>>, vector<32x12xf32>
    %cst = arith.constant dense<0.000000e+00> : vector<32x12xf32>
    %2 = tpu.matmul %0, %1, %cst {dimension_numbers = #tpu.dot_dimension_numbers<[1], [0], [0], [1], [0, 0, 1, 1], [], []>} : vector<32x32xf32>, vector<32x12xf32>, vector<32x12xf32> -> vector<32x12xf32>
    %c0_3 = arith.constant 0 : index
    %c0_4 = arith.constant 0 : index
    %3 = vector.load %arg2[%c0_3, %c0_4] : memref<32x32xf32, #tpu.memory_space<vmem>>, vector<32x32xf32>
    %c0_5 = arith.constant 0 : index
    %c0_6 = arith.constant 0 : index
    %4 = vector.load %arg5[%c0_5, %c0_6] : memref<32x12xf32, #tpu.memory_space<vmem>>, vector<32x12xf32>
    %cst_7 = arith.constant dense<0.000000e+00> : vector<32x12xf32>
    %5 = tpu.matmul %3, %4, %cst_7 {dimension_numbers = #tpu.dot_dimension_numbers<[1], [0], [0], [1], [0, 0, 1, 1], [], []>} : vector<32x32xf32>, vector<32x12xf32>, vector<32x12xf32> -> vector<32x12xf32>
    %6 = arith.addf %2, %5 : vector<32x12xf32>
    %c0_8 = arith.constant 0 : index
    %c0_9 = arith.constant 0 : index
    %7 = vector.load %arg3[%c0_8, %c0_9] : memref<32x16xf32, #tpu.memory_space<vmem>>, vector<32x16xf32>
    %c0_10 = arith.constant 0 : index
    %c0_11 = arith.constant 0 : index
    %8 = vector.load %arg6[%c0_10, %c0_11] : memref<16x12xf32, #tpu.memory_space<vmem>>, vector<16x12xf32>
    %cst_12 = arith.constant dense<0.000000e+00> : vector<32x12xf32>
    %9 = tpu.matmul %7, %8, %cst_12 {dimension_numbers = #tpu.dot_dimension_numbers<[1], [0], [0], [1], [0, 0, 1, 1], [], []>} : vector<32x16xf32>, vector<16x12xf32>, vector<32x12xf32> -> vector<32x12xf32>
    %10 = arith.addf %6, %9 : vector<32x12xf32>
    %c0_13 = arith.constant 0 : index
    %c0_14 = arith.constant 0 : index
    %11 = vector.load %arg7[%c0_13, %c0_14] : memref<1x12xf32, #tpu.memory_space<vmem>>, vector<1x12xf32>
    %12 = vector.broadcast %11 : vector<1x12xf32> to vector<32x12xf32>
    %13 = arith.addf %10, %12 : vector<32x12xf32>
    %cst_15 = arith.constant 0.000000e+00 : f32
    %14 = vector.broadcast %cst_15 : f32 to vector<32x12xf32>
    %15 = arith.maximumf %13, %14 : vector<32x12xf32>
    %c0_16 = arith.constant 0 : index
    %c0_17 = arith.constant 0 : index
    %16 = vector.load %arg8[%c0_16, %c0_17] : memref<12x4xf32, #tpu.memory_space<vmem>>, vector<12x4xf32>
    %cst_18 = arith.constant dense<0.000000e+00> : vector<32x4xf32>
    %17 = tpu.matmul %15, %16, %cst_18 {dimension_numbers = #tpu.dot_dimension_numbers<[1], [0], [0], [1], [0, 0, 1, 1], [], []>} : vector<32x12xf32>, vector<12x4xf32>, vector<32x4xf32> -> vector<32x4xf32>
    %c0_19 = arith.constant 0 : index
    %c0_20 = arith.constant 0 : index
    %18 = vector.load %arg9[%c0_19, %c0_20] : memref<1x4xf32, #tpu.memory_space<vmem>>, vector<1x4xf32>
    %19 = vector.broadcast %18 : vector<1x4xf32> to vector<32x4xf32>
    %20 = arith.addf %17, %19 : vector<32x4xf32>
    %c0_21 = arith.constant 0 : index
    %c0_22 = arith.constant 0 : index
    %21 = vector.load %arg10[%c0_21, %c0_22] : memref<32x4xf32, #tpu.memory_space<vmem>>, vector<32x4xf32>
    tpu.vector_store %arg10[%c0_21, %c0_22], %20 {strides = array<i32>} : memref<32x4xf32, #tpu.memory_space<vmem>>, vector<32x4xf32>,
    return
  }
  func.func @transform_0(%arg0: i32) -> (i32, i32) {
    %c0_i32 = arith.constant 0 : i32
    %c0_i32_0 = arith.constant 0 : i32
    return %arg0, %c0_i32 : i32, i32
  }
  func.func @transform_1(%arg0: i32) -> (i32, i32) {
    %c0_i32 = arith.constant 0 : i32
    %c0_i32_0 = arith.constant 0 : i32
    return %arg0, %c0_i32 : i32, i32
  }
  func.func @transform_2(%arg0: i32) -> (i32, i32) {
    %c0_i32 = arith.constant 0 : i32
    %c0_i32_0 = arith.constant 0 : i32
    return %arg0, %c0_i32 : i32, i32
  }
  func.func @transform_3(%arg0: i32) -> (i32, i32) {
    %c0_i32 = arith.constant 0 : i32
    %c0_i32_0 = arith.constant 0 : i32
    %c0_i32_1 = arith.constant 0 : i32
    return %c0_i32, %c0_i32_0 : i32, i32
  }
  func.func @transform_4(%arg0: i32) -> (i32, i32) {
    %c0_i32 = arith.constant 0 : i32
    %c0_i32_0 = arith.constant 0 : i32
    %c0_i32_1 = arith.constant 0 : i32
    return %c0_i32, %c0_i32_0 : i32, i32
  }
  func.func @transform_5(%arg0: i32) -> (i32, i32) {
    %c0_i32 = arith.constant 0 : i32
    %c0_i32_0 = arith.constant 0 : i32
    %c0_i32_1 = arith.constant 0 : i32
    return %c0_i32, %c0_i32_0 : i32, i32
  }
  func.func @transform_6(%arg0: i32) -> (i32, i32) {
    %c0_i32 = arith.constant 0 : i32
    %c0_i32_0 = arith.constant 0 : i32
    %c0_i32_1 = arith.constant 0 : i32
    return %c0_i32, %c0_i32_0 : i32, i32
  }
  func.func @transform_7(%arg0: i32) -> (i32, i32) {
    %c0_i32 = arith.constant 0 : i32
    %c0_i32_0 = arith.constant 0 : i32
    %c0_i32_1 = arith.constant 0 : i32
    return %c0_i32, %c0_i32_0 : i32, i32
  }
  func.func @transform_8(%arg0: i32) -> (i32, i32) {
    %c0_i32 = arith.constant 0 : i32
    %c0_i32_0 = arith.constant 0 : i32
    %c0_i32_1 = arith.constant 0 : i32
    return %c0_i32, %c0_i32_0 : i32, i32
  }
  func.func @transform_9(%arg0: i32) -> (i32, i32) {
    %c0_i32 = arith.constant 0 : i32
    %c0_i32_0 = arith.constant 0 : i32
    return %arg0, %c0_i32 : i32, i32
  }
}

</mosaic_0001>

<llo_original>
// kernel: tpu_custom_call.1
$region0: #{tpu_custom_call.1}
  #allocation0 [shape = 'u32[]', space=smem, size = 0x4, offset = 0x4, fixed_abs, tag = 'smem constant byte address 0x4 - core index']
  #allocation1 [shape = 'u32[144,128]{1,0:T(1,128)}', space=vmem, size = 0x12000, scoped, tag = 'internal scratch']
  %s0 = inlined_call_operand.vmem [shape: f32[100,32], index: 0, kind: input, shape index: {}]
  %s1 = inlined_call_operand.vmem [shape: f32[100,32], index: 1, kind: input, shape index: {}]
  %s2 = inlined_call_operand.vmem [shape: f32[100,16], index: 2, kind: input, shape index: {}]
  %s3 = inlined_call_operand.vmem [shape: f32[32,12], index: 3, kind: input, shape index: {}]
  %s4 = inlined_call_operand.vmem [shape: f32[32,12], index: 4, kind: input, shape index: {}]
  %s5 = inlined_call_operand.vmem [shape: f32[16,12], index: 5, kind: input, shape index: {}]
  %s6 = inlined_call_operand.vmem [shape: f32[1,12], index: 6, kind: input, shape index: {}]
  %s7 = inlined_call_operand.vmem [shape: f32[12,4], index: 7, kind: input, shape index: {}]
  %s8 = inlined_call_operand.vmem [shape: f32[1,4], index: 8, kind: input, shape index: {}]
  %s9 = inlined_call_operand.vmem [shape: f32[100,4], index: 9, kind: output, shape index: {}]
  %s10 = sld [smem:[#allocation0]]
  $region117: #{tpu_custom_call.1} parent=0
    _
  %s12 = ssub.s32 1, %s10
  %s13 = scalar_select 0, %s12, %s10
  $region1: #{tpu_custom_call.1} parent=0
    #allocation2 [shape = 'u8[32768]{0}', space=vmem, size = 0x8000, scoped, tag = 'output window, operand 0']
    loop: start=0, step=1, limit=6
    $region2: #{tpu_custom_call.1} parent=1 // loop_pre_header
      _
    $region3: #{tpu_custom_call.1} parent=1 // loop_header
      %s15 = sphi 0, %s19
      %p16 = scmp.ge.s32.totalorder %s15, 6
      %s25 = sphi 0, %s27
      %s28 = sphi 0, %s25
      %s29 = sphi 0, %s28
      %s45 = sphi 0, %s29
      %s51 = sphi 0, %s53
      %s54 = sphi 0, %s51
      %s55 = sphi 0, %s54
      %s71 = sphi 0, %s55
      %s77 = sphi 0, %s79
      %s80 = sphi 0, %s77
      %s81 = sphi 0, %s80
      %s97 = sphi 0, %s81
      %s101 = sphi 0, %s101
      %s103 = sphi 0, %s101
      %s104 = sphi 0, %s103
      %s118 = sphi 0, %s104
      %s122 = sphi 0, %s122
      %s124 = sphi 0, %s122
      %s125 = sphi 0, %s124
      %s139 = sphi 0, %s125
      %s143 = sphi 0, %s143
      %s145 = sphi 0, %s143
      %s146 = sphi 0, %s145
      %s160 = sphi 0, %s146
      %s164 = sphi 0, %s164
      %s166 = sphi 0, %s164
      %s167 = sphi 0, %s166
      %s181 = sphi 0, %s167
      %s185 = sphi 0, %s185
      %s187 = sphi 0, %s185
      %s188 = sphi 0, %s187
      %s202 = sphi 0, %s188
      %s206 = sphi 0, %s206
      %s208 = sphi 0, %s206
      %s209 = sphi 0, %s208
      %s223 = sphi 0, %s209
      %s229 = sphi 0, %s231
      %s232 = sphi 0, %s229
      %s233 = sphi 0, %s232
      %s249 = sphi 0, %s233
    $region4: #{tpu_custom_call.1} parent=1 // loop_header_branch
      %18 = sbr.rel (%p16) target = $region8
    $region5: #{tpu_custom_call.1} parent=1 // loop_body
      %s20 = ssub.s32 %s15, 1
      %s21 = ssub.s32 %s15, 2
      %s22 = sadd.s32 %s15, 1
      %s23 = ssub.s32 %s15, %s22
      %p24 = scmp.eq.s32.totalorder %s23, 0
      %s26 = sadd.s32 %s25, 1
      %s27 = scalar_select %p24, %s25, %s26
      %p30 = pneg %p24
      %p31 = scmp.eq.s32.totalorder %s15, 3
      %p32 = por %p30, %p31
      %p33 = scmp.ne.s32.totalorder %s25, %s28
      %p34 = scmp.eq.s32.totalorder %s15, 0
      %p35 = por %p33, %p34
      %p36 = scmp.ne.s32.totalorder %s25, %s28
      %p37 = scmp.eq.s32.totalorder %s20, 3
      %p38 = por %p36, %p37
      %p39 = scmp.ne.s32.totalorder %s28, %s29
      %p40 = scmp.eq.s32.totalorder %s20, 0
      %p41 = por %p39, %p40
      %p42 = scmp.ne.s32.totalorder %s28, %s29
      %p43 = scmp.eq.s32.totalorder %s21, 3
      %p44 = por %p42, %p43
      %p46 = scmp.ne.s32.totalorder %s29, %s45
      %p47 = scmp.eq.s32.totalorder %s21, 0
      %p48 = por %p46, %p47
      %s49 = ssub.s32 %s15, %s22
      %p50 = scmp.eq.s32.totalorder %s49, 0
      %s52 = sadd.s32 %s51, 1
      %s53 = scalar_select %p50, %s51, %s52
      %p56 = pneg %p50
      %p57 = scmp.eq.s32.totalorder %s15, 3
      %p58 = por %p56, %p57
      %p59 = scmp.ne.s32.totalorder %s51, %s54
      %p60 = scmp.eq.s32.totalorder %s15, 0
      %p61 = por %p59, %p60
      %p62 = scmp.ne.s32.totalorder %s51, %s54
      %p63 = scmp.eq.s32.totalorder %s20, 3
      %p64 = por %p62, %p63
      %p65 = scmp.ne.s32.totalorder %s54, %s55
      %p66 = scmp.eq.s32.totalorder %s20, 0
      %p67 = por %p65, %p66
      %p68 = scmp.ne.s32.totalorder %s54, %s55
      %p69 = scmp.eq.s32.totalorder %s21, 3
      %p70 = por %p68, %p69
      %p72 = scmp.ne.s32.totalorder %s55, %s71
      %p73 = scmp.eq.s32.totalorder %s21, 0
      %p74 = por %p72, %p73
      %s75 = ssub.s32 %s15, %s22
      %p76 = scmp.eq.s32.totalorder %s75, 0
      %s78 = sadd.s32 %s77, 1
      %s79 = scalar_select %p76, %s77, %s78
      %p82 = pneg %p76
      %p83 = scmp.eq.s32.totalorder %s15, 3
      %p84 = por %p82, %p83
      %p85 = scmp.ne.s32.totalorder %s77, %s80
      %p86 = scmp.eq.s32.totalorder %s15, 0
      %p87 = por %p85, %p86
      %p88 = scmp.ne.s32.totalorder %s77, %s80
      %p89 = scmp.eq.s32.totalorder %s20, 3
      %p90 = por %p88, %p89
      %p91 = scmp.ne.s32.totalorder %s80, %s81
      %p92 = scmp.eq.s32.totalorder %s20, 0
      %p93 = por %p91, %p92
      %p94 = scmp.ne.s32.totalorder %s80, %s81
      %p95 = scmp.eq.s32.totalorder %s21, 3
      %p96 = por %p94, %p95
      %p98 = scmp.ne.s32.totalorder %s81, %s97
      %p99 = scmp.eq.s32.totalorder %s21, 0
      %p100 = por %p98, %p99
      %s102 = sadd.s32 %s101, 1
      %p105 = scmp.eq.s32.totalorder %s15, 3
      %p106 = scmp.ne.s32.totalorder %s101, %s103
      %p107 = scmp.eq.s32.totalorder %s15, 0
      %p108 = por %p106, %p107
      %p109 = scmp.ne.s32.totalorder %s101, %s103
      %p110 = scmp.eq.s32.totalorder %s20, 3
      %p111 = por %p109, %p110
      %p112 = scmp.ne.s32.totalorder %s103, %s104
      %p113 = scmp.eq.s32.totalorder %s20, 0
      %p114 = por %p112, %p113
      %p115 = scmp.ne.s32.totalorder %s103, %s104
      %p116 = scmp.eq.s32.totalorder %s21, 3
      %p117 = por %p115, %p116
      %p119 = scmp.ne.s32.totalorder %s104, %s118
      %p120 = scmp.eq.s32.totalorder %s21, 0
      %p121 = por %p119, %p120
      %s123 = sadd.s32 %s122, 1
      %p126 = scmp.eq.s32.totalorder %s15, 3
      %p127 = scmp.ne.s32.totalorder %s122, %s124
      %p128 = scmp.eq.s32.totalorder %s15, 0
      %p129 = por %p127, %p128
      %p130 = scmp.ne.s32.totalorder %s122, %s124
      %p131 = scmp.eq.s32.totalorder %s20, 3
      %p132 = por %p130, %p131
      %p133 = scmp.ne.s32.totalorder %s124, %s125
      %p134 = scmp.eq.s32.totalorder %s20, 0
      %p135 = por %p133, %p134
      %p136 = scmp.ne.s32.totalorder %s124, %s125
      %p137 = scmp.eq.s32.totalorder %s21, 3
      %p138 = por %p136, %p137
      %p140 = scmp.ne.s32.totalorder %s125, %s139
      %p141 = scmp.eq.s32.totalorder %s21, 0
      %p142 = por %p140, %p141
      %s144 = sadd.s32 %s143, 1
      %p147 = scmp.eq.s32.totalorder %s15, 3
      %p148 = scmp.ne.s32.totalorder %s143, %s145
      %p149 = scmp.eq.s32.totalorder %s15, 0
      %p150 = por %p148, %p149
      %p151 = scmp.ne.s32.totalorder %s143, %s145
      %p152 = scmp.eq.s32.totalorder %s20, 3
      %p153 = por %p151, %p152
      %p154 = scmp.ne.s32.totalorder %s145, %s146
      %p155 = scmp.eq.s32.totalorder %s20, 0
      %p156 = por %p154, %p155
      %p157 = scmp.ne.s32.totalorder %s145, %s146
      %p158 = scmp.eq.s32.totalorder %s21, 3
      %p159 = por %p157, %p158
      %p161 = scmp.ne.s32.totalorder %s146, %s160
      %p162 = scmp.eq.s32.totalorder %s21, 0
      %p163 = por %p161, %p162
      %s165 = sadd.s32 %s164, 1
      %p168 = scmp.eq.s32.totalorder %s15, 3
      %p169 = scmp.ne.s32.totalorder %s164, %s166
      %p170 = scmp.eq.s32.totalorder %s15, 0
      %p171 = por %p169, %p170
      %p172 = scmp.ne.s32.totalorder %s164, %s166
      %p173 = scmp.eq.s32.totalorder %s20, 3
      %p174 = por %p172, %p173
      %p175 = scmp.ne.s32.totalorder %s166, %s167
      %p176 = scmp.eq.s32.totalorder %s20, 0
      %p177 = por %p175, %p176
      %p178 = scmp.ne.s32.totalorder %s166, %s167
      %p179 = scmp.eq.s32.totalorder %s21, 3
      %p180 = por %p178, %p179
      %p182 = scmp.ne.s32.totalorder %s167, %s181
      %p183 = scmp.eq.s32.totalorder %s21, 0
      %p184 = por %p182, %p183
      %s186 = sadd.s32 %s185, 1
      %p189 = scmp.eq.s32.totalorder %s15, 3
      %p190 = scmp.ne.s32.totalorder %s185, %s187
      %p191 = scmp.eq.s32.totalorder %s15, 0
      %p192 = por %p190, %p191
      %p193 = scmp.ne.s32.totalorder %s185, %s187
      %p194 = scmp.eq.s32.totalorder %s20, 3
      %p195 = por %p193, %p194
      %p196 = scmp.ne.s32.totalorder %s187, %s188
      %p197 = scmp.eq.s32.totalorder %s20, 0
      %p198 = por %p196, %p197
      %p199 = scmp.ne.s32.totalorder %s187, %s188
      %p200 = scmp.eq.s32.totalorder %s21, 3
      %p201 = por %p199, %p200
      %p203 = scmp.ne.s32.totalorder %s188, %s202
      %p204 = scmp.eq.s32.totalorder %s21, 0
      %p205 = por %p203, %p204
      %s207 = sadd.s32 %s206, 1
      %p210 = scmp.eq.s32.totalorder %s15, 3
      %p211 = scmp.ne.s32.totalorder %s206, %s208
      %p212 = scmp.eq.s32.totalorder %s15, 0
      %p213 = por %p211, %p212
      %p214 = scmp.ne.s32.totalorder %s206, %s208
      %p215 = scmp.eq.s32.totalorder %s20, 3
      %p216 = por %p214, %p215
      %p217 = scmp.ne.s32.totalorder %s208, %s209
      %p218 = scmp.eq.s32.totalorder %s20, 0
      %p219 = por %p217, %p218
      %p220 = scmp.ne.s32.totalorder %s208, %s209
      %p221 = scmp.eq.s32.totalorder %s21, 3
      %p222 = por %p220, %p221
      %p224 = scmp.ne.s32.totalorder %s209, %s223
      %p225 = scmp.eq.s32.totalorder %s21, 0
      %p226 = por %p224, %p225
      %s227 = ssub.s32 %s15, %s22
      %p228 = scmp.eq.s32.totalorder %s227, 0
      %s230 = sadd.s32 %s229, 1
      %s231 = scalar_select %p228, %s229, %s230
      %p234 = pneg %p228
      %p235 = scmp.eq.s32.totalorder %s15, 3
      %p236 = por %p234, %p235
      %p237 = scmp.ne.s32.totalorder %s229, %s232
      %p238 = scmp.eq.s32.totalorder %s15, 0
      %p239 = por %p237, %p238
      %p240 = scmp.ne.s32.totalorder %s229, %s232
      %p241 = scmp.eq.s32.totalorder %s20, 3
      %p242 = por %p240, %p241
      %p243 = scmp.ne.s32.totalorder %s232, %s233
      %p244 = scmp.eq.s32.totalorder %s20, 0
      %p245 = por %p243, %p244
      %p246 = scmp.ne.s32.totalorder %s232, %s233
      %p247 = scmp.eq.s32.totalorder %s21, 3
      %p248 = por %p246, %p247
      %p250 = scmp.ne.s32.totalorder %s233, %s249
      %p251 = scmp.eq.s32.totalorder %s21, 0
      %p252 = por %p250, %p251
      %p253 = scmp.le.s32.totalorder 1, %s15
      %p254 = scmp.lt.s32.totalorder %s15, 5
      %p255 = pnand %p253, %p254
      %p256 = pneg %p255
      // Predicated region
      $region9: #{tpu_custom_call.1} parent=5 // pred_check
        _
      $region10: #{tpu_custom_call.1} parent=5 // pred_check_branch
        %258 = sbr.rel (%p255) target = $region12
      $region11: #{tpu_custom_call.1} parent=5 // pred_region
        %s259 = ssub.s32 %s15, 1
        // Predicated region
        $region13: #{tpu_custom_call.1} parent=11 // pred_check
          %p260 = pneg %p114
        $region14: #{tpu_custom_call.1} parent=11 // pred_check_branch
          %262 = sbr.rel (%p260) target = $region16
        $region15: #{tpu_custom_call.1} parent=11 // pred_region
          _
        $region16: #{tpu_custom_call.1} parent=11 // pred_fallthru
          _
        // Predicated region
        $region17: #{tpu_custom_call.1} parent=11 // pred_check
          %p263 = pneg %p135
        $region18: #{tpu_custom_call.1} parent=11 // pred_check_branch
          %265 = sbr.rel (%p263) target = $region20
        $region19: #{tpu_custom_call.1} parent=11 // pred_region
          _
        $region20: #{tpu_custom_call.1} parent=11 // pred_fallthru
          _
        // Predicated region
        $region21: #{tpu_custom_call.1} parent=11 // pred_check
          %p266 = pneg %p156
        $region22: #{tpu_custom_call.1} parent=11 // pred_check_branch
          %268 = sbr.rel (%p266) target = $region24
        $region23: #{tpu_custom_call.1} parent=11 // pred_region
          _
        $region24: #{tpu_custom_call.1} parent=11 // pred_fallthru
          _
        // Predicated region
        $region25: #{tpu_custom_call.1} parent=11 // pred_check
          %p269 = pneg %p177
        $region26: #{tpu_custom_call.1} parent=11 // pred_check_branch
          %271 = sbr.rel (%p269) target = $region28
        $region27: #{tpu_custom_call.1} parent=11 // pred_region
          _
        $region28: #{tpu_custom_call.1} parent=11 // pred_fallthru
          _
        // Predicated region
        $region29: #{tpu_custom_call.1} parent=11 // pred_check
          %p272 = pneg %p198
        $region30: #{tpu_custom_call.1} parent=11 // pred_check_branch
          %274 = sbr.rel (%p272) target = $region32
        $region31: #{tpu_custom_call.1} parent=11 // pred_region
          _
        $region32: #{tpu_custom_call.1} parent=11 // pred_fallthru
          _
        // Predicated region
        $region33: #{tpu_custom_call.1} parent=11 // pred_check
          %p275 = pneg %p219
        $region34: #{tpu_custom_call.1} parent=11 // pred_check_branch
          %277 = sbr.rel (%p275) target = $region36
        $region35: #{tpu_custom_call.1} parent=11 // pred_region
          _
        $region36: #{tpu_custom_call.1} parent=11 // pred_fallthru
          _
      $region12: #{tpu_custom_call.1} parent=5 // pred_fallthru
        _
      %p278 = scmp.lt.s32.totalorder %s15, 4
      // Predicated region
      $region37: #{tpu_custom_call.1} parent=5 // pred_check
        %p279 = pneg %p278
      $region38: #{tpu_custom_call.1} parent=5 // pred_check_branch
        %281 = sbr.rel (%p279) target = $region40
      $region39: #{tpu_custom_call.1} parent=5 // pred_region
        // Predicated region
        $region41: #{tpu_custom_call.1} parent=39 // pred_check
          %p282 = pneg %p35
        $region42: #{tpu_custom_call.1} parent=39 // pred_check_branch
          %284 = sbr.rel (%p282) target = $region44
        $region43: #{tpu_custom_call.1} parent=39 // pred_region
          %s285 = smul.u32 4, %s15
          %s286 = ssub.s32 13, %s285
          %p287 = scmp.lt.s32.totalorder %s286, 4
          %s288 = scalar_select %p287, %s286, 4
          %s289 = smul.u32 128, %s288
          %p290 = scmp.lt.s32.totalorder %s285, 12
          %s291 = scalar_select %p290, %s285, 12
          %s292 = smul.addr %s291, 8
          %s293 = scalar_lea.vmem %s0, %s292
          %s294 = smul.u32 4, %s15
          %s295 = ssub.s32 13, %s294
          %p296 = scmp.lt.s32.totalorder %s295, 4
          %s297 = scalar_select %p296, %s295, 4
          %s298 = smul.u32 128, %s297
        $region44: #{tpu_custom_call.1} parent=39 // pred_fallthru
          _
        // Predicated region
        $region45: #{tpu_custom_call.1} parent=39 // pred_check
          %p299 = pneg %p61
        $region46: #{tpu_custom_call.1} parent=39 // pred_check_branch
          %301 = sbr.rel (%p299) target = $region48
        $region47: #{tpu_custom_call.1} parent=39 // pred_region
          %s302 = smul.u32 4, %s15
          %s303 = ssub.s32 13, %s302
          %p304 = scmp.lt.s32.totalorder %s303, 4
          %s305 = scalar_select %p304, %s303, 4
          %s306 = smul.u32 128, %s305
          %p307 = scmp.lt.s32.totalorder %s302, 12
          %s308 = scalar_select %p307, %s302, 12
          %s309 = smul.addr %s308, 8
          %s310 = scalar_lea.vmem %s1, %s309
          %s311 = smul.u32 4, %s15
          %s312 = ssub.s32 13, %s311
          %p313 = scmp.lt.s32.totalorder %s312, 4
          %s314 = scalar_select %p313, %s312, 4
          %s315 = smul.u32 128, %s314
        $region48: #{tpu_custom_call.1} parent=39 // pred_fallthru
          _
        // Predicated region
        $region49: #{tpu_custom_call.1} parent=39 // pred_check
          %p316 = pneg %p87
        $region50: #{tpu_custom_call.1} parent=39 // pred_check_branch
          %318 = sbr.rel (%p316) target = $region52
        $region51: #{tpu_custom_call.1} parent=39 // pred_region
          %s319 = smul.u32 4, %s15
          %s320 = ssub.s32 13, %s319
          %p321 = scmp.lt.s32.totalorder %s320, 4
          %s322 = scalar_select %p321, %s320, 4
          %s323 = smul.u32 128, %s322
          %p324 = scmp.lt.s32.totalorder %s319, 12
          %s325 = scalar_select %p324, %s319, 12
          %s326 = smul.addr %s325, 8
          %s327 = scalar_lea.vmem %s2, %s326
          %s328 = smul.u32 4, %s15
          %s329 = ssub.s32 13, %s328
          %p330 = scmp.lt.s32.totalorder %s329, 4
          %s331 = scalar_select %p330, %s329, 4
          %s332 = smul.u32 128, %s331
        $region52: #{tpu_custom_call.1} parent=39 // pred_fallthru
          _
      $region40: #{tpu_custom_call.1} parent=5 // pred_fallthru
        _
      %p333 = scmp.le.s32.totalorder 1, %s15
      %p334 = scmp.lt.s32.totalorder %s15, 5
      %p335 = pnand %p333, %p334
      %p336 = pneg %p335
      // Predicated region
      $region53: #{tpu_custom_call.1} parent=5 // pred_check
        _
      $region54: #{tpu_custom_call.1} parent=5 // pred_check_branch
        %338 = sbr.rel (%p335) target = $region56
      $region55: #{tpu_custom_call.1} parent=5 // pred_region
        %s339 = ssub.s32 %s15, 1
        %s340 = smul.u32 4, %s20
        %s341 = ssub.s32 13, %s340
        %p342 = scmp.lt.s32.totalorder %s341, 4
        %s343 = scalar_select %p342, %s341, 4
        %s344 = smul.u32 128, %s343
        %p345 = scmp.lt.s32.totalorder %s340, 12
        %s346 = scalar_select %p345, %s340, 12
        %s347 = smul.addr %s346, 8
        %s348 = scalar_lea.vmem %s0, %s347
        %p349 = pneg %p41
        %p350 = pneg %p38
        %s351 = smul.u32 4, %s20
        %s352 = ssub.s32 13, %s351
        %p353 = scmp.lt.s32.totalorder %s352, 4
        %s354 = scalar_select %p353, %s352, 4
        %s355 = smul.u32 128, %s354
        %p356 = scmp.lt.s32.totalorder %s351, 12
        %s357 = scalar_select %p356, %s351, 12
        %s358 = smul.addr %s357, 8
        %s359 = scalar_lea.vmem %s1, %s358
        %p360 = pneg %p67
        %p361 = pneg %p64
        %s362 = smul.u32 4, %s20
        %s363 = ssub.s32 13, %s362
        %p364 = scmp.lt.s32.totalorder %s363, 4
        %s365 = scalar_select %p364, %s363, 4
        %s366 = smul.u32 128, %s365
        %p367 = scmp.lt.s32.totalorder %s362, 12
        %s368 = scalar_select %p367, %s362, 12
        %s369 = smul.addr %s368, 8
        %s370 = scalar_lea.vmem %s2, %s369
        %p371 = pneg %p93
        %p372 = pneg %p90
        %p373 = pneg %p114
        %p374 = pneg %p111
        %p375 = pneg %p135
        %p376 = pneg %p132
        %p377 = pneg %p156
        %p378 = pneg %p153
        %p379 = pneg %p177
        %p380 = pneg %p174
        %p381 = pneg %p198
        %p382 = pneg %p195
        %p383 = pneg %p219
        %p384 = pneg %p216
        %p385 = pneg %p245
        %p386 = pneg %p242
        %s387 = sand.u32 %s232, 1
        %s388 = sand.u32 %s232, 1
        %s389 = smul.addr %s388, 32
        %s390 = scalar_lea.vmem [#allocation2], %s389
        %s391 = smul.u32 4, %s20
        %s392 = ssub.s32 13, %s391
        %p393 = scmp.lt.s32.totalorder %s392, 4
        %s394 = scalar_select %p393, %s392, 4
        %s395 = smul.u32 128, %s394
        %p396 = scmp.lt.s32.totalorder %s391, 12
        %s397 = scalar_select %p396, %s391, 12
        %s398 = smul.addr %s397, 8
        %s399 = scalar_lea.vmem %s0, %s398
        %s400 = smul.u32 4, %s20
        %s401 = ssub.s32 13, %s400
        %p402 = scmp.lt.s32.totalorder %s401, 4
        %s403 = scalar_select %p402, %s401, 4
        %s404 = smul.u32 128, %s403
        %s405 = smul.u32 4, %s20
        %s406 = ssub.s32 13, %s405
        %p407 = scmp.lt.s32.totalorder %s406, 4
        %s408 = scalar_select %p407, %s406, 4
        %s409 = smul.u32 128, %s408
        %p410 = scmp.lt.s32.totalorder %s405, 12
        %s411 = scalar_select %p410, %s405, 12
        %s412 = smul.addr %s411, 8
        %s413 = scalar_lea.vmem %s1, %s412
        %s414 = smul.u32 4, %s20
        %s415 = ssub.s32 13, %s414
        %p416 = scmp.lt.s32.totalorder %s415, 4
        %s417 = scalar_select %p416, %s415, 4
        %s418 = smul.u32 128, %s417
        %s419 = smul.u32 4, %s20
        %s420 = ssub.s32 13, %s419
        %p421 = scmp.lt.s32.totalorder %s420, 4
        %s422 = scalar_select %p421, %s420, 4
        %s423 = smul.u32 128, %s422
        %p424 = scmp.lt.s32.totalorder %s419, 12
        %s425 = scalar_select %p424, %s419, 12
        %s426 = smul.addr %s425, 8
        %s427 = scalar_lea.vmem %s2, %s426
        %s428 = smul.u32 4, %s20
        %s429 = ssub.s32 13, %s428
        %p430 = scmp.lt.s32.totalorder %s429, 4
        %s431 = scalar_select %p430, %s429, 4
        %s432 = smul.u32 128, %s431
        %s433 = smul.u32 4, %s20
        %s434 = ssub.s32 13, %s433
        %p435 = scmp.lt.s32.totalorder %s434, 4
        %s436 = scalar_select %p435, %s434, 4
        %s437 = smul.u32 128, %s436
        %v438 = vld [vmem:[%s399] sm:$0xff]
        %v439 = vld [vmem:[%s399 + $0x8] sm:$0xff]
        %v440 = vld [vmem:[%s399 + $0x10] sm:$0xff]
        %v441 = vld [vmem:[%s399 + $0x18] sm:$0xff]
        %v442 = vld [vmem:[%s3] sm:$0xff]
        %v443 = vld [vmem:[%s3 + $0x8] sm:$0xff]
        %v444 = vld [vmem:[%s3 + $0x10] sm:$0xff]
        %v445 = vld [vmem:[%s3 + $0x18] sm:$0xff]
        %v446 = vld [vmem:[%s413] sm:$0xff]
        %v447 = vld [vmem:[%s413 + $0x8] sm:$0xff]
        %v448 = vld [vmem:[%s413 + $0x10] sm:$0xff]
        %v449 = vld [vmem:[%s413 + $0x18] sm:$0xff]
        %v450 = vld [vmem:[%s4] sm:$0xff]
        %v451 = vld [vmem:[%s4 + $0x8] sm:$0xff]
        %v452 = vld [vmem:[%s4 + $0x10] sm:$0xff]
        %v453 = vld [vmem:[%s4 + $0x18] sm:$0xff]
        %vm454 = vcmask 261120
        %v456 = vsel %vm454, %v446, 0
        %v459 = vsel %vm454, %v447, 0
        %v462 = vsel %vm454, %v448, 0
        %v465 = vsel %vm454, %v449, 0
        %467 = vmatprep.subr.mxu0 0.0
        %468 = vmatpush1.msra.mxu0 %v450
        %469 = vmatprep.subr.mxu0 0.0
        %470 = vmatpush1.msra.mxu0 %v451
        %471 = vmatprep.subr.mxu0 0.0
        %472 = vmatpush1.msra.mxu0 %v452
        %473 = vmatprep.subr.mxu0 0.0
        %474 = vmatpush1.msra.mxu0 %v453
        %475 = vmatprep.subr.mxu0 0.0
        %476 = vmatpush1.msra.mxu0 0.0
        %477 = vmatprep.subr.mxu0 0.0
        %478 = vmatpush1.msra.mxu0 0.0
        %479 = vmatprep.subr.mxu0 0.0
        %480 = vmatpush1.msra.mxu0 0.0
        %481 = vmatprep.subr.mxu0 0.0
        %482 = vmatpush1.msra.mxu0 0.0
        %483 = vmatprep.subr.mxu0 0.0
        %484 = vmatpush1.msra.mxu0 0.0
        %485 = vmatprep.subr.mxu0 0.0
        %486 = vmatpush1.msra.mxu0 0.0
        %487 = vmatprep.subr.mxu0 0.0
        %488 = vmatpush1.msra.mxu0 0.0
        %489 = vmatprep.subr.mxu0 0.0
        %490 = vmatpush1.msra.mxu0 0.0
        %491 = vmatprep.subr.mxu0 0.0
        %492 = vmatpush1.msra.mxu0 0.0
        %493 = vmatprep.subr.mxu0 0.0
        %494 = vmatpush1.msra.mxu0 0.0
        %495 = vmatprep.subr.mxu0 0.0
        %496 = vmatpush1.msra.mxu0 0.0
        %497 = vmatprep.subr.mxu0 0.0
        %498 = vmatpush1.msra.mxu0 0.0
        %499 = vmatprep.subr.mxu0 0.0
        %500 = vmatpush1.msra.mxu0 0.0
        %501 = vmatprep.subr.mxu0 0.0
        %502 = vmatpush1.msra.mxu0 0.0
        %503 = vmatprep.subr.mxu0 0.0
        %504 = vmatpush1.msra.mxu0 0.0
        %505 = vmatprep.subr.mxu0 0.0
        %506 = vmatpush1.msra.mxu0 0.0
        %507 = vmatprep.subr.mxu0 0.0
        %508 = vmatpush1.msra.mxu0 0.0
        %509 = vmatprep.subr.mxu0 0.0
        %510 = vmatpush1.msra.mxu0 0.0
        %511 = vmatprep.subr.mxu0 0.0
        %512 = vmatpush1.msra.mxu0 0.0
        %513 = vmatprep.subr.mxu0 0.0
        %514 = vmatpush1.msra.mxu0 0.0
        %515 = vmatprep.subr.mxu0 0.0
        %516 = vmatpush1.msra.mxu0 0.0
        %517 = vmatprep.subr.mxu0 0.0
        %518 = vmatpush1.msra.mxu0 0.0
        %519 = vmatprep.subr.mxu0 0.0
        %520 = vmatpush1.msra.mxu0 0.0
        %521 = vmatprep.subr.mxu0 0.0
        %522 = vmatpush1.msra.mxu0 0.0
        %523 = vmatprep.subr.mxu0 0.0
        %524 = vmatpush1.msra.mxu0 0.0
        %525 = vmatprep.subr.mxu0 0.0
        %526 = vmatpush1.msra.mxu0 0.0
        %527 = vmatprep.subr.mxu0 0.0
        %528 = vmatpush1.msra.mxu0 0.0
        %529 = vmatprep.subr.mxu0 0.0
        %530 = vmatpush1.msra.mxu0 0.0
        %531 = vmatprep.mubr.f32.mxu0 0.0
        %532 = vmatmul.mubr.f32.gmra.mrb[0].mxu0 %v456
        %v533 = vpop.f32.mrb[0].mxu0
        %v534 = vadd.f32 0.0, %v533
        %v535 = vpop.f32.mrb[0].mxu0
        %536 = vmatprep.mubr.f32.mxu0 0.0
        %537 = vmatmul.mubr.f32.gmra.mrb[0].mxu0 %v459
        %v538 = vpop.f32.mrb[0].mxu0
        %v539 = vadd.f32 0.0, %v538
        %v540 = vpop.f32.mrb[0].mxu0
        %541 = vmatprep.mubr.f32.mxu0 0.0
        %542 = vmatmul.mubr.f32.gmra.mrb[0].mxu0 %v462
        %v543 = vpop.f32.mrb[0].mxu0
        %v544 = vadd.f32 0.0, %v543
        %v545 = vpop.f32.mrb[0].mxu0
        %546 = vmatprep.mubr.f32.mxu0 0.0
        %547 = vmatmul.mubr.f32.gmra.mrb[0].mxu0 %v465
        %v548 = vpop.f32.mrb[0].mxu0
        %v549 = vadd.f32 0.0, %v548
        %v550 = vpop.f32.mrb[0].mxu0
        %551 = vdwg.mxu0
        %v553 = vsel %vm454, %v438, 0
        %v556 = vsel %vm454, %v439, 0
        %v559 = vsel %vm454, %v440, 0
        %v562 = vsel %vm454, %v441, 0
        %564 = vmatprep.subr.mxu0 0.0
        %565 = vmatpush1.msra.mxu0 %v442
        %566 = vmatprep.subr.mxu0 0.0
        %567 = vmatpush1.msra.mxu0 %v443
        %568 = vmatprep.subr.mxu0 0.0
        %569 = vmatpush1.msra.mxu0 %v444
        %570 = vmatprep.subr.mxu0 0.0
        %571 = vmatpush1.msra.mxu0 %v445
        %572 = vmatprep.subr.mxu0 0.0
        %573 = vmatpush1.msra.mxu0 0.0
        %574 = vmatprep.subr.mxu0 0.0
        %575 = vmatpush1.msra.mxu0 0.0
        %576 = vmatprep.subr.mxu0 0.0
        %577 = vmatpush1.msra.mxu0 0.0
        %578 = vmatprep.subr.mxu0 0.0
        %579 = vmatpush1.msra.mxu0 0.0
        %580 = vmatprep.subr.mxu0 0.0
        %581 = vmatpush1.msra.mxu0 0.0
        %582 = vmatprep.subr.mxu0 0.0
        %583 = vmatpush1.msra.mxu0 0.0
        %584 = vmatprep.subr.mxu0 0.0
        %585 = vmatpush1.msra.mxu0 0.0
        %586 = vmatprep.subr.mxu0 0.0
        %587 = vmatpush1.msra.mxu0 0.0
        %588 = vmatprep.subr.mxu0 0.0
        %589 = vmatpush1.msra.mxu0 0.0
        %590 = vmatprep.subr.mxu0 0.0
        %591 = vmatpush1.msra.mxu0 0.0
        %592 = vmatprep.subr.mxu0 0.0
        %593 = vmatpush1.msra.mxu0 0.0
        %594 = vmatprep.subr.mxu0 0.0
        %595 = vmatpush1.msra.mxu0 0.0
        %596 = vmatprep.subr.mxu0 0.0
        %597 = vmatpush1.msra.mxu0 0.0
        %598 = vmatprep.subr.mxu0 0.0
        %599 = vmatpush1.msra.mxu0 0.0
        %600 = vmatprep.subr.mxu0 0.0
        %601 = vmatpush1.msra.mxu0 0.0
        %602 = vmatprep.subr.mxu0 0.0
        %603 = vmatpush1.msra.mxu0 0.0
        %604 = vmatprep.subr.mxu0 0.0
        %605 = vmatpush1.msra.mxu0 0.0
        %606 = vmatprep.subr.mxu0 0.0
        %607 = vmatpush1.msra.mxu0 0.0
        %608 = vmatprep.subr.mxu0 0.0
        %609 = vmatpush1.msra.mxu0 0.0
        %610 = vmatprep.subr.mxu0 0.0
        %611 = vmatpush1.msra.mxu0 0.0
        %612 = vmatprep.subr.mxu0 0.0
        %613 = vmatpush1.msra.mxu0 0.0
        %614 = vmatprep.subr.mxu0 0.0
        %615 = vmatpush1.msra.mxu0 0.0
        %616 = vmatprep.subr.mxu0 0.0
        %617 = vmatpush1.msra.mxu0 0.0
        %618 = vmatprep.subr.mxu0 0.0
        %619 = vmatpush1.msra.mxu0 0.0
        %620 = vmatprep.subr.mxu0 0.0
        %621 = vmatpush1.msra.mxu0 0.0
        %622 = vmatprep.subr.mxu0 0.0
        %623 = vmatpush1.msra.mxu0 0.0
        %624 = vmatprep.subr.mxu0 0.0
        %625 = vmatpush1.msra.mxu0 0.0
        %626 = vmatprep.subr.mxu0 0.0
        %627 = vmatpush1.msra.mxu0 0.0
        %628 = vmatprep.mubr.f32.mxu0 0.0
        %629 = vmatmul.mubr.f32.gmra.mrb[0].mxu0 %v553
        %v630 = vpop.f32.mrb[0].mxu0
        %v631 = vadd.f32 %v534, %v630
        %v632 = vpop.f32.mrb[0].mxu0
        %633 = vmatprep.mubr.f32.mxu0 0.0
        %634 = vmatmul.mubr.f32.gmra.mrb[0].mxu0 %v556
        %v635 = vpop.f32.mrb[0].mxu0
        %v636 = vadd.f32 %v539, %v635
        %v637 = vpop.f32.mrb[0].mxu0
        %638 = vmatprep.mubr.f32.mxu0 0.0
        %639 = vmatmul.mubr.f32.gmra.mrb[0].mxu0 %v559
        %v640 = vpop.f32.mrb[0].mxu0
        %v641 = vadd.f32 %v544, %v640
        %v642 = vpop.f32.mrb[0].mxu0
        %643 = vmatprep.mubr.f32.mxu0 0.0
        %644 = vmatmul.mubr.f32.gmra.mrb[0].mxu0 %v562
        %v645 = vpop.f32.mrb[0].mxu0
        %v646 = vadd.f32 %v549, %v645
        %v647 = vpop.f32.mrb[0].mxu0
        %648 = vdwg.mxu0
        %v649 = vld [vmem:[%s427] sm:$0xff]
        %v650 = vld [vmem:[%s427 + $0x8] sm:$0xff]
        %v651 = vld [vmem:[%s427 + $0x10] sm:$0xff]
        %v652 = vld [vmem:[%s427 + $0x18] sm:$0xff]
        %v653 = vld [vmem:[%s5] sm:$0xff]
        %v654 = vld [vmem:[%s5 + $0x8] sm:$0xff]
        %vm655 = vcmask 130048
        %v657 = vsel %vm655, %v649, 0
        %v660 = vsel %vm655, %v650, 0
        %v663 = vsel %vm655, %v651, 0
        %v666 = vsel %vm655, %v652, 0
        %668 = vmatprep.subr.mxu0 0.0
        %669 = vmatpush1.msra.mxu0 %v653
        %670 = vmatprep.subr.mxu0 0.0
        %671 = vmatpush1.msra.mxu0 %v654
        %672 = vmatprep.subr.mxu0 0.0
        %673 = vmatpush1.msra.mxu0 0.0
        %674 = vmatprep.subr.mxu0 0.0
        %675 = vmatpush1.msra.mxu0 0.0
        %676 = vmatprep.subr.mxu0 0.0
        %677 = vmatpush1.msra.mxu0 0.0
        %678 = vmatprep.subr.mxu0 0.0
        %679 = vmatpush1.msra.mxu0 0.0
        %680 = vmatprep.subr.mxu0 0.0
        %681 = vmatpush1.msra.mxu0 0.0
        %682 = vmatprep.subr.mxu0 0.0
        %683 = vmatpush1.msra.mxu0 0.0
        %684 = vmatprep.subr.mxu0 0.0
        %685 = vmatpush1.msra.mxu0 0.0
        %686 = vmatprep.subr.mxu0 0.0
        %687 = vmatpush1.msra.mxu0 0.0
        %688 = vmatprep.subr.mxu0 0.0
        %689 = vmatpush1.msra.mxu0 0.0
        %690 = vmatprep.subr.mxu0 0.0
        %691 = vmatpush1.msra.mxu0 0.0
        %692 = vmatprep.subr.mxu0 0.0
        %693 = vmatpush1.msra.mxu0 0.0
        %694 = vmatprep.subr.mxu0 0.0
        %695 = vmatpush1.msra.mxu0 0.0
        %696 = vmatprep.subr.mxu0 0.0
        %697 = vmatpush1.msra.mxu0 0.0
        %698 = vmatprep.subr.mxu0 0.0
        %699 = vmatpush1.msra.mxu0 0.0
        %700 = vmatprep.subr.mxu0 0.0
        %701 = vmatpush1.msra.mxu0 0.0
        %702 = vmatprep.subr.mxu0 0.0
        %703 = vmatpush1.msra.mxu0 0.0
        %704 = vmatprep.subr.mxu0 0.0
        %705 = vmatpush1.msra.mxu0 0.0
        %706 = vmatprep.subr.mxu0 0.0
        %707 = vmatpush1.msra.mxu0 0.0
        %708 = vmatprep.subr.mxu0 0.0
        %709 = vmatpush1.msra.mxu0 0.0
        %710 = vmatprep.subr.mxu0 0.0
        %711 = vmatpush1.msra.mxu0 0.0
        %712 = vmatprep.subr.mxu0 0.0
        %713 = vmatpush1.msra.mxu0 0.0
        %714 = vmatprep.subr.mxu0 0.0
        %715 = vmatpush1.msra.mxu0 0.0
        %716 = vmatprep.subr.mxu0 0.0
        %717 = vmatpush1.msra.mxu0 0.0
        %718 = vmatprep.subr.mxu0 0.0
        %719 = vmatpush1.msra.mxu0 0.0
        %720 = vmatprep.subr.mxu0 0.0
        %721 = vmatpush1.msra.mxu0 0.0
        %722 = vmatprep.subr.mxu0 0.0
        %723 = vmatpush1.msra.mxu0 0.0
        %724 = vmatprep.subr.mxu0 0.0
        %725 = vmatpush1.msra.mxu0 0.0
        %726 = vmatprep.subr.mxu0 0.0
        %727 = vmatpush1.msra.mxu0 0.0
        %728 = vmatprep.subr.mxu0 0.0
        %729 = vmatpush1.msra.mxu0 0.0
        %730 = vmatprep.subr.mxu0 0.0
        %731 = vmatpush1.msra.mxu0 0.0
        %732 = vmatprep.mubr.f32.mxu0 0.0
        %733 = vmatmul.mubr.f32.gmra.mrb[0].mxu0 %v657
        %v734 = vpop.f32.mrb[0].mxu0
        %v735 = vadd.f32 0.0, %v734
        %v736 = vpop.f32.mrb[0].mxu0
        %737 = vmatprep.mubr.f32.mxu0 0.0
        %738 = vmatmul.mubr.f32.gmra.mrb[0].mxu0 %v660
        %v739 = vpop.f32.mrb[0].mxu0
        %v740 = vadd.f32 0.0, %v739
        %v741 = vpop.f32.mrb[0].mxu0
        %742 = vmatprep.mubr.f32.mxu0 0.0
        %743 = vmatmul.mubr.f32.gmra.mrb[0].mxu0 %v663
        %v744 = vpop.f32.mrb[0].mxu0
        %v745 = vadd.f32 0.0, %v744
        %v746 = vpop.f32.mrb[0].mxu0
        %747 = vmatprep.mubr.f32.mxu0 0.0
        %748 = vmatmul.mubr.f32.gmra.mrb[0].mxu0 %v666
        %v749 = vpop.f32.mrb[0].mxu0
        %v750 = vadd.f32 0.0, %v749
        %v751 = vpop.f32.mrb[0].mxu0
        %752 = vdwg.mxu0
        %v753 = vadd.f32 %v631, %v735
        %v754 = vadd.f32 %v636, %v740
        %v755 = vadd.f32 %v641, %v745
        %v756 = vadd.f32 %v646, %v750
        %v757 = vld [vmem:[%s6] sm:$0x1]
        %v759 = vlaneseq
        %v760 = vshrl.u32 %v759, 7
        %v761 = vsub.s32 0, %v760
        %v762 = vrot.slane %v757, %v761
        %v764 = vadd.f32 %v753, %v762
        %v765 = vadd.f32 %v754, %v762
        %v766 = vadd.f32 %v755, %v762
        %v767 = vadd.f32 %v756, %v762
        %v768 = vmax.f32 %v764, 0.0
        %v769 = vmax.f32 %v765, 0.0
        %v770 = vmax.f32 %v766, 0.0
        %v771 = vmax.f32 %v767, 0.0
        %v772 = vld [vmem:[%s7] sm:$0xff]
        %v773 = vld [vmem:[%s7 + $0x8] sm:$0xf]
        %v774 = vld [vmem:[%s8] sm:$0x1]
        %v776 = vlaneseq
        %v777 = vshrl.u32 %v776, 7
        %v778 = vsub.s32 0, %v777
        %v779 = vrot.slane %v774, %v778
        %vm781 = vcmask 97280
        %v783 = vsel %vm781, %v768, 0
        %v786 = vsel %vm781, %v769, 0
        %v789 = vsel %vm781, %v770, 0
        %v792 = vsel %vm781, %v771, 0
        %vm794 = vcmask 1043456
        %v796 = vsel %vm794, %v773, 0
        %798 = vmatprep.subr.mxu0 0.0
        %799 = vmatpush1.msra.mxu0 %v772
        %800 = vmatprep.subr.mxu0 0.0
        %801 = vmatpush1.msra.mxu0 %v796
        %802 = vmatprep.subr.mxu0 0.0
        %803 = vmatpush1.msra.mxu0 0.0
        %804 = vmatprep.subr.mxu0 0.0
        %805 = vmatpush1.msra.mxu0 0.0
        %806 = vmatprep.subr.mxu0 0.0
        %807 = vmatpush1.msra.mxu0 0.0
        %808 = vmatprep.subr.mxu0 0.0
        %809 = vmatpush1.msra.mxu0 0.0
        %810 = vmatprep.subr.mxu0 0.0
        %811 = vmatpush1.msra.mxu0 0.0
        %812 = vmatprep.subr.mxu0 0.0
        %813 = vmatpush1.msra.mxu0 0.0
        %814 = vmatprep.subr.mxu0 0.0
        %815 = vmatpush1.msra.mxu0 0.0
        %816 = vmatprep.subr.mxu0 0.0
        %817 = vmatpush1.msra.mxu0 0.0
        %818 = vmatprep.subr.mxu0 0.0
        %819 = vmatpush1.msra.mxu0 0.0
        %820 = vmatprep.subr.mxu0 0.0
        %821 = vmatpush1.msra.mxu0 0.0
        %822 = vmatprep.subr.mxu0 0.0
        %823 = vmatpush1.msra.mxu0 0.0
        %824 = vmatprep.subr.mxu0 0.0
        %825 = vmatpush1.msra.mxu0 0.0
        %826 = vmatprep.subr.mxu0 0.0
        %827 = vmatpush1.msra.mxu0 0.0
        %828 = vmatprep.subr.mxu0 0.0
        %829 = vmatpush1.msra.mxu0 0.0
        %830 = vmatprep.subr.mxu0 0.0
        %831 = vmatpush1.msra.mxu0 0.0
        %832 = vmatprep.subr.mxu0 0.0
        %833 = vmatpush1.msra.mxu0 0.0
        %834 = vmatprep.subr.mxu0 0.0
        %835 = vmatpush1.msra.mxu0 0.0
        %836 = vmatprep.subr.mxu0 0.0
        %837 = vmatpush1.msra.mxu0 0.0
        %838 = vmatprep.subr.mxu0 0.0
        %839 = vmatpush1.msra.mxu0 0.0
        %840 = vmatprep.subr.mxu0 0.0
        %841 = vmatpush1.msra.mxu0 0.0
        %842 = vmatprep.subr.mxu0 0.0
        %843 = vmatpush1.msra.mxu0 0.0
        %844 = vmatprep.subr.mxu0 0.0
        %845 = vmatpush1.msra.mxu0 0.0
        %846 = vmatprep.subr.mxu0 0.0
        %847 = vmatpush1.msra.mxu0 0.0
        %848 = vmatprep.subr.mxu0 0.0
        %849 = vmatpush1.msra.mxu0 0.0
        %850 = vmatprep.subr.mxu0 0.0
        %851 = vmatpush1.msra.mxu0 0.0
        %852 = vmatprep.subr.mxu0 0.0
        %853 = vmatpush1.msra.mxu0 0.0
        %854 = vmatprep.subr.mxu0 0.0
        %855 = vmatpush1.msra.mxu0 0.0
        %856 = vmatprep.subr.mxu0 0.0
        %857 = vmatpush1.msra.mxu0 0.0
        %858 = vmatprep.subr.mxu0 0.0
        %859 = vmatpush1.msra.mxu0 0.0
        %860 = vmatprep.subr.mxu0 0.0
        %861 = vmatpush1.msra.mxu0 0.0
        %862 = vmatprep.mubr.f32.mxu0 0.0
        %863 = vmatmul.mubr.f32.gmra.mrb[0].mxu0 %v783
        %v864 = vpop.f32.mrb[0].mxu0
        %v865 = vadd.f32 %v779, %v864
        %v866 = vpop.f32.mrb[0].mxu0
        %867 = vmatprep.mubr.f32.mxu0 0.0
        %868 = vmatmul.mubr.f32.gmra.mrb[0].mxu0 %v786
        %v869 = vpop.f32.mrb[0].mxu0
        %v870 = vadd.f32 %v779, %v869
        %v871 = vpop.f32.mrb[0].mxu0
        %872 = vmatprep.mubr.f32.mxu0 0.0
        %873 = vmatmul.mubr.f32.gmra.mrb[0].mxu0 %v789
        %v874 = vpop.f32.mrb[0].mxu0
        %v875 = vadd.f32 %v779, %v874
        %v876 = vpop.f32.mrb[0].mxu0
        %877 = vmatprep.mubr.f32.mxu0 0.0
        %878 = vmatmul.mubr.f32.gmra.mrb[0].mxu0 %v792
        %v879 = vpop.f32.mrb[0].mxu0
        %v880 = vadd.f32 %v779, %v879
        %v881 = vpop.f32.mrb[0].mxu0
        %882 = vdwg.mxu0
        %vm883 = vcmask 31744
        %884 = vst.msk [vmem:[%s390] sm:$0xff] %vm883, %v865
        %885 = vst.msk [vmem:[%s390 + $0x8] sm:$0xff] %vm883, %v870
        %886 = vst.msk [vmem:[%s390 + $0x10] sm:$0xff] %vm883, %v875
        %887 = vst.msk [vmem:[%s390 + $0x18] sm:$0xff] %vm883, %v880
        %s888 = sand.u32 %s232, 1
        %s889 = sand.u32 %s232, 1
        %s890 = smul.addr %s889, 32
        %s891 = scalar_lea.vmem [#allocation2], %s890
        // Predicated region
        $region57: #{tpu_custom_call.1} parent=55 // pred_check
          %p892 = pneg %p242
        $region58: #{tpu_custom_call.1} parent=55 // pred_check_branch
          %894 = sbr.rel (%p892) target = $region60
        $region59: #{tpu_custom_call.1} parent=55 // pred_region
          %s895 = smul.u32 4, %s20
          %s896 = ssub.s32 13, %s895
          %p897 = scmp.lt.s32.totalorder %s896, 4
          %s898 = scalar_select %p897, %s896, 4
          %s899 = smul.u32 128, %s898
          %p900 = scmp.ne.s32.totalorder 0, %s899
          %s901 = smul.addr %s895, 8
          %s902 = scalar_lea.vmem %s9, %s901
          // Predicated region
          $region61: #{tpu_custom_call.1} parent=59 // pred_check
            %p903 = pneg %p900
          $region62: #{tpu_custom_call.1} parent=59 // pred_check_branch
            %905 = sbr.rel (%p903) target = $region64
          $region63: #{tpu_custom_call.1} parent=59 // pred_region
            // Predicated region
            $region65: #{tpu_custom_call.1} parent=63 // pred_check
              _
            $region66: #{tpu_custom_call.1} parent=63 // pred_check_branch
              %907 = sbr.rel (0) target = $region68
            $region67: #{tpu_custom_call.1} parent=63 // pred_region
              // Predicated region
              $region87: #{tpu_custom_call.1} parent=67 // pred_check
                _
              $region88: #{tpu_custom_call.1} parent=67 // pred_check_branch
                %962 = sbr.rel (0) target = $region90
              $region89: #{tpu_custom_call.1} parent=67 // pred_region
                %s963 = sshrl.u32 %s898, 2
                // While loop
                $region91: #{tpu_custom_call.1} parent=89 // loop_pre_header
                  _
                $region92: #{tpu_custom_call.1} parent=89 // loop_header
                  %s965 = sphi 0, %s967
                  %p966 = scmp.ge.s32.totalorder %s965, %s963
                  %s970 = sphi 0, %s983
                  %s971 = sphi %s891, %s986
                  %s972 = sphi %s902, %s987
                $region93: #{tpu_custom_call.1} parent=89 // loop_header_branch
                  %969 = sbr.rel (%p966) target = $region97
                $region94: #{tpu_custom_call.1} parent=89 // loop_body
                  %v973 = vld [vmem:[%s971] sm:$0xff]
                  %974 = vst [vmem:[%s972] sm:$0xff] %v973
                  %v975 = vld [vmem:[%s971 + $0x8] sm:$0xff]
                  %976 = vst [vmem:[%s972 + $0x8] sm:$0xff] %v975
                  %v977 = vld [vmem:[%s971 + $0x10] sm:$0xff]
                  %978 = vst [vmem:[%s972 + $0x10] sm:$0xff] %v977
                  %v979 = vld [vmem:[%s971 + $0x18] sm:$0xff]
                  %980 = vst [vmem:[%s972 + $0x18] sm:$0xff] %v979
                  %s981 = sadd.s32 1, %s970
                  %p982 = scmp.ge.s32.totalorder %s981, %s963
                  %s983 = scalar_select %p982, 0, %s981
                  %s984 = smul.u32 %s983, 32
                  %s985 = smul.u32 %s983, 32
                  %s986 = scalar_lea.vmem %s891, %s984 [#allocation2]
                  %s987 = scalar_lea.vmem %s902, %s985
                $region95: #{tpu_custom_call.1} parent=89 // loop_footer
                  %s967 = sadd.s32 %s965, 1
                $region96: #{tpu_custom_call.1} parent=89 // loop_footer_branch
                  %964 = sbr.rel target = $region92
                $region97: #{tpu_custom_call.1} parent=89 // loop_exit
                  _
                %s988 = sshrl.u32 %s898, 2
                %s989 = sand.u32 %s898, 3
                %s990 = smul.u32 %s988, 4
                %s991 = smul.u32 8, %s990
                %s992 = scalar_lea.vmem %s891, %s991 [#allocation2]
                %s993 = smul.u32 8, %s990
                %s994 = scalar_lea.vmem %s902, %s993
                // While loop
                $region98: #{tpu_custom_call.1} parent=89 // loop_pre_header
                  _
                $region99: #{tpu_custom_call.1} parent=89 // loop_header
                  %s996 = sphi 0, %s998
                  %p997 = scmp.ge.s32.totalorder %s996, %s989
                  %s1001 = sphi 0, %s1008
                  %s1002 = sphi %s992, %s1011
                  %s1003 = sphi %s994, %s1012
                $region100: #{tpu_custom_call.1} parent=89 // loop_header_branch
                  %1000 = sbr.rel (%p997) target = $region104
                $region101: #{tpu_custom_call.1} parent=89 // loop_body
                  %v1004 = vld [vmem:[%s1002] sm:$0xff]
                  %1005 = vst [vmem:[%s1003] sm:$0xff] %v1004
                  %s1006 = sadd.s32 1, %s1001
                  %p1007 = scmp.ge.s32.totalorder %s1006, %s989
                  %s1008 = scalar_select %p1007, 0, %s1006
                  %s1009 = smul.u32 %s1008, 8
                  %s1010 = smul.u32 %s1008, 8
                  %s1011 = scalar_lea.vmem %s992, %s1009 [#allocation2]
                  %s1012 = scalar_lea.vmem %s994, %s1010
                $region102: #{tpu_custom_call.1} parent=89 // loop_footer
                  %s998 = sadd.s32 %s996, 1
                $region103: #{tpu_custom_call.1} parent=89 // loop_footer_branch
                  %995 = sbr.rel target = $region99
                $region104: #{tpu_custom_call.1} parent=89 // loop_exit
                  _
              $region90: #{tpu_custom_call.1} parent=67 // pred_fallthru
                _
              // Predicated region
              $region105: #{tpu_custom_call.1} parent=67 // pred_check
                _
              $region106: #{tpu_custom_call.1} parent=67 // pred_check_branch
                %1014 = sbr.rel target = $region108
              $region107: #{tpu_custom_call.1} parent=67 // pred_region
                _
              $region108: #{tpu_custom_call.1} parent=67 // pred_fallthru
                _
            $region68: #{tpu_custom_call.1} parent=63 // pred_fallthru
              _
            // Predicated region
            $region69: #{tpu_custom_call.1} parent=63 // pred_check
              _
            $region70: #{tpu_custom_call.1} parent=63 // pred_check_branch
              %909 = sbr.rel target = $region72
            $region71: #{tpu_custom_call.1} parent=63 // pred_region
              %s911 = sshrl.u32 %s898, 2
              // While loop
              $region73: #{tpu_custom_call.1} parent=71 // loop_pre_header
                _
              $region74: #{tpu_custom_call.1} parent=71 // loop_header
                %s913 = sphi 0, %s915
                %p914 = scmp.ge.s32.totalorder %s913, %s911
                %s918 = sphi 0, %s931
                %s919 = sphi %s891, %s934
                %s920 = sphi %s902, %s935
              $region75: #{tpu_custom_call.1} parent=71 // loop_header_branch
                %917 = sbr.rel (%p914) target = $region79
              $region76: #{tpu_custom_call.1} parent=71 // loop_body
                %v921 = vld [vmem:[%s919] sm:$0xff]
                %922 = vst [vmem:[%s920] sm:$0xff] %v921
                %v923 = vld [vmem:[%s919 + $0x8] sm:$0xff]
                %924 = vst [vmem:[%s920 + $0x8] sm:$0xff] %v923
                %v925 = vld [vmem:[%s919 + $0x10] sm:$0xff]
                %926 = vst [vmem:[%s920 + $0x10] sm:$0xff] %v925
                %v927 = vld [vmem:[%s919 + $0x18] sm:$0xff]
                %928 = vst [vmem:[%s920 + $0x18] sm:$0xff] %v927
                %s929 = sadd.s32 1, %s918
                %p930 = scmp.ge.s32.totalorder %s929, %s911
                %s931 = scalar_select %p930, 0, %s929
                %s932 = smul.u32 %s931, 32
                %s933 = smul.u32 %s931, 32
                %s934 = scalar_lea.vmem %s891, %s932 [#allocation2]
                %s935 = scalar_lea.vmem %s902, %s933
              $region77: #{tpu_custom_call.1} parent=71 // loop_footer
                %s915 = sadd.s32 %s913, 1
              $region78: #{tpu_custom_call.1} parent=71 // loop_footer_branch
                %912 = sbr.rel target = $region74
              $region79: #{tpu_custom_call.1} parent=71 // loop_exit
                _
              %s936 = sshrl.u32 %s898, 2
              %s937 = sand.u32 %s898, 3
              %s938 = smul.u32 %s936, 4
              %s939 = smul.u32 8, %s938
              %s940 = scalar_lea.vmem %s891, %s939 [#allocation2]
              %s941 = smul.u32 8, %s938
              %s942 = scalar_lea.vmem %s902, %s941
              // While loop
              $region80: #{tpu_custom_call.1} parent=71 // loop_pre_header
                _
              $region81: #{tpu_custom_call.1} parent=71 // loop_header
                %s944 = sphi 0, %s946
                %p945 = scmp.ge.s32.totalorder %s944, %s937
                %s949 = sphi 0, %s956
                %s950 = sphi %s940, %s959
                %s951 = sphi %s942, %s960
              $region82: #{tpu_custom_call.1} parent=71 // loop_header_branch
                %948 = sbr.rel (%p945) target = $region86
              $region83: #{tpu_custom_call.1} parent=71 // loop_body
                %v952 = vld [vmem:[%s950] sm:$0xff]
                %953 = vst [vmem:[%s951] sm:$0xff] %v952
                %s954 = sadd.s32 1, %s949
                %p955 = scmp.ge.s32.totalorder %s954, %s937
                %s956 = scalar_select %p955, 0, %s954
                %s957 = smul.u32 %s956, 8
                %s958 = smul.u32 %s956, 8
                %s959 = scalar_lea.vmem %s940, %s957 [#allocation2]
                %s960 = scalar_lea.vmem %s942, %s958
              $region84: #{tpu_custom_call.1} parent=71 // loop_footer
                %s946 = sadd.s32 %s944, 1
              $region85: #{tpu_custom_call.1} parent=71 // loop_footer_branch
                %943 = sbr.rel target = $region81
              $region86: #{tpu_custom_call.1} parent=71 // loop_exit
                _
            $region72: #{tpu_custom_call.1} parent=63 // pred_fallthru
              _
          $region64: #{tpu_custom_call.1} parent=59 // pred_fallthru
            _
          %1015 = vnop
        $region60: #{tpu_custom_call.1} parent=55 // pred_fallthru
          _
      $region56: #{tpu_custom_call.1} parent=5 // pred_fallthru
        _
      %p1016 = scmp.le.s32.totalorder 2, %s15
      // Predicated region
      $region109: #{tpu_custom_call.1} parent=5 // pred_check
        %p1017 = pneg %p1016
      $region110: #{tpu_custom_call.1} parent=5 // pred_check_branch
        %1019 = sbr.rel (%p1017) target = $region112
      $region111: #{tpu_custom_call.1} parent=5 // pred_region
        %s1020 = ssub.s32 %s15, 2
        // Predicated region
        $region113: #{tpu_custom_call.1} parent=111 // pred_check
          %p1021 = pneg %p248
        $region114: #{tpu_custom_call.1} parent=111 // pred_check_branch
          %1023 = sbr.rel (%p1021) target = $region116
        $region115: #{tpu_custom_call.1} parent=111 // pred_region
          %s1024 = sand.u32 %s233, 1
          %s1025 = sand.u32 %s233, 1
          %s1026 = smul.addr %s1025, 32
          %s1027 = scalar_lea.vmem [#allocation2], %s1026
        $region116: #{tpu_custom_call.1} parent=111 // pred_fallthru
          _
      $region112: #{tpu_custom_call.1} parent=5 // pred_fallthru
        _
    $region6: #{tpu_custom_call.1} parent=1 // loop_footer
      %s19 = sadd.s32 1, %s15
    $region7: #{tpu_custom_call.1} parent=1 // loop_footer_branch
      %14 = sbr.rel target = $region3
    $region8: #{tpu_custom_call.1} parent=1 // loop_exit
      _

</llo_original>
